<compile_context>
chip_gen: v5e
topology: v5e:2x2
jax: 0.10.0
libtpu: 0.0.40
codegen_flags: <defaults>
</compile_context>

<pallas_src>
import jax
import jax.numpy as jnp
from jax.experimental import pallas as pl
from jax.experimental.pallas import tpu as pltpu


# ---------------------------------------------------------------------------
# Helpers
# ---------------------------------------------------------------------------

_LANE = 128                       # vreg lane width (last dim granularity)
_VMEM_BUDGET = 32 * 1024 * 1024   # conservative block budget (v5e/v6e/v7x safe)
_VMEM_LIMIT = 48 * 1024 * 1024    # scoped VMEM limit handed to the compiler


def _round_up(v, m):
    return (v + m - 1) // m * m


def _sublane(dtype):
    # Sublane packing granularity: 8 rows for 32-bit, 16 for 16-bit, 32 for 8-bit.
    return max(8, 32 // jnp.dtype(dtype).itemsize)


def _largest_divisor_tile(total, max_tile, align=_LANE):
    """Largest multiple of `align` that divides `total` and is <= max_tile.

    `total` is always a multiple of `align`, so this terminates at `align`.
    """
    t = max(align, min(total, (max_tile // align) * align))
    while total % t != 0:
        t -= align
    return t


def _choose_tm(Bp, sub, max_tm):
    """Batch tile: multiple of `sub`, <= max_tm, keeping pad waste < ~5%."""
    if Bp <= max_tm:
        return Bp
    tm = max((max_tm // sub) * sub, sub)
    while tm > sub:
        padded = _round_up(Bp, tm)
        if (padded - Bp) * 20 <= padded:   # < ~5% dead rows
            break
        tm -= sub
    return max(tm, sub)


# ---------------------------------------------------------------------------
# Kernels
# ---------------------------------------------------------------------------

def _final_kernel(x_ref, w_ref, b_ref, o_ref):
    # x:(tm,K)  w:(K,tn)  b:(1,tn)  o:(tm,tn) — full reduction inside the block.
    y = jnp.dot(x_ref[...], w_ref[...], preferred_element_type=jnp.float32)
    y = y + b_ref[...].astype(jnp.float32)
    o_ref[...] = jnp.maximum(y, 0.0).astype(o_ref.dtype)


def _final_kernel_acc(x_ref, w_ref, b_ref, o_ref, acc_ref):
    # Reduction axis split across the (last, "arbitrary") grid axis:
    # accumulate in an f32 VMEM scratch, add bias + relu on the final step.
    k = pl.program_id(2)

    @pl.when(k == 0)
    def _():
        acc_ref[...] = jnp.zeros_like(acc_ref)

    acc_ref[...] += jnp.dot(x_ref[...], w_ref[...],
                            preferred_element_type=jnp.float32)

    @pl.when(k == pl.num_programs(2) - 1)
    def _():
        y = acc_ref[...] + b_ref[...].astype(jnp.float32)
        o_ref[...] = jnp.maximum(y, 0.0).astype(o_ref.dtype)


# ---------------------------------------------------------------------------
# Wrappers
# ---------------------------------------------------------------------------

def prepare_final_params(weight, bias, *, lane_align=_LANE):
    """One-time parameter layout prep (call at parameter-load time).

    weight: (C, H) in PyTorch nn.Linear layout; bias: (C,).
    Returns (w_hc, b2d): weight pre-transposed to (Hp, Cp) and bias as
    (1, Cp), both zero-padded to lane-dense multiples of `lane_align`.
    Zero padding does not change the matmul result.
    """
    C, H = weight.shape
    assert bias.shape == (C,)
    Hp = _round_up(H, lane_align)
    Cp = _round_up(C, lane_align)
    w_hc = jnp.zeros((Hp, Cp), weight.dtype).at[:H, :C].set(weight.T)
    b2d = jnp.zeros((1, Cp), bias.dtype).at[:, :C].set(bias)
    return w_hc, b2d


def final_forward_prepared(x, w_hc, b2d, num_classes, *,
                           max_tm=512, max_tn=2048, max_tk=2048,
                           force_tiled=False):
    """relu(x @ W^T + b) with W/b already prepared by prepare_final_params."""
    B, H = x.shape
    Hp, Cp = w_hc.shape
    assert H <= Hp and num_classes <= Cp
    out_dtype = x.dtype
    itemsize = jnp.dtype(out_dtype).itemsize
    sub = _sublane(out_dtype)
    Bp = _round_up(B, sub)

    # ----- Gridless single-block fast path (gated on VMEM bytes) -----
    single_bytes = (Bp * Hp + Hp * Cp + Cp + Bp * Cp) * itemsize
    if (not force_tiled) and single_bytes <= _VMEM_BUDGET // 2 and Bp <= 1024:
        xp = x if (Bp, Hp) == (B, H) else (
            jnp.zeros((Bp, Hp), x.dtype).at[:B, :H].set(x))
        out_p = pl.pallas_call(
            _final_kernel,
            out_shape=jax.ShapeDtypeStruct((Bp, Cp), out_dtype),
            in_specs=[pl.BlockSpec(memory_space=pltpu.MemorySpace.VMEM)] * 3,
            out_specs=pl.BlockSpec(memory_space=pltpu.MemorySpace.VMEM),
            compiler_params=pltpu.CompilerParams(
                vmem_limit_bytes=_VMEM_LIMIT),
        )(xp, w_hc, b2d)
        if (Bp, Cp) == (B, num_classes):
            return out_p
        return out_p[:B, :num_classes]

    # ----- Tiled path: grid over (batch, out-cols[, reduction]) -----
    tn = _largest_divisor_tile(Cp, max_tn)
    tk = _largest_divisor_tile(Hp, max_tk)
    tm = _choose_tm(Bp, sub, max_tm)

    def _bytes(tm_, tn_, tk_):
        # Double-buffered x / w / out / bias blocks + f32 accumulator scratch.
        return (2 * (tm_ * tk_ + tk_ * tn_ + tm_ * tn_ + tn_) * itemsize
                + tm_ * tn_ * 4)

    while _bytes(tm, tn, tk) > _VMEM_BUDGET and tk > _LANE:
        tk = _largest_divisor_tile(Hp, tk - _LANE)
    while _bytes(tm, tn, tk) > _VMEM_BUDGET and tn > _LANE:
        tn = _largest_divisor_tile(Cp, tn - _LANE)
    while _bytes(tm, tn, tk) > _VMEM_BUDGET and tm > sub:
        tm = max(sub, tm - sub)

    nm = pl.cdiv(Bp, tm)
    nn = Cp // tn
    nk = Hp // tk
    Bt = nm * tm

    xp = x if (Bt, Hp) == (B, H) else (
        jnp.zeros((Bt, Hp), x.dtype).at[:B, :H].set(x))

    if nk == 1:
        kernel = _final_kernel
        grid = (nm, nn)
        in_specs = [
            pl.BlockSpec((tm, tk), lambda i, j: (i, 0)),
            pl.BlockSpec((tk, tn), lambda i, j: (0, j)),
            pl.BlockSpec((1, tn), lambda i, j: (0, j)),
        ]
        out_spec = pl.BlockSpec((tm, tn), lambda i, j: (i, j))
        scratch = []
        dims = ("parallel", "parallel")
    else:
        kernel = _final_kernel_acc
        grid = (nm, nn, nk)
        in_specs = [
            pl.BlockSpec((tm, tk), lambda i, j, k: (i, k)),
            pl.BlockSpec((tk, tn), lambda i, j, k: (k, j)),
            pl.BlockSpec((1, tn), lambda i, j, k: (0, j)),
        ]
        out_spec = pl.BlockSpec((tm, tn), lambda i, j, k: (i, j))
        scratch = [pltpu.VMEM((tm, tn), jnp.float32)]
        dims = ("parallel", "parallel", "arbitrary")

    out_p = pl.pallas_call(
        kernel,
        out_shape=jax.ShapeDtypeStruct((Bt, Cp), out_dtype),
        grid_spec=pltpu.PrefetchScalarGridSpec(
            num_scalar_prefetch=0,
            grid=grid,
            in_specs=in_specs,
            out_specs=out_spec,
            scratch_shapes=scratch,
        ),
        compiler_params=pltpu.CompilerParams(
            dimension_semantics=dims,
            vmem_limit_bytes=_VMEM_LIMIT,
        ),
    )(xp, w_hc, b2d)

    if (Bt, Cp) == (B, num_classes):
        return out_p
    return out_p[:B, :num_classes]


def final_forward(x, weight, bias, **kw):
    """Convenience wrapper: relu(x @ weight.T + bias).

    Prefer prepare_final_params() once + final_forward_prepared() per step;
    this wrapper redoes the weight transpose/pad on every call.
    """
    w_hc, b2d = prepare_final_params(weight, bias)
    return final_forward_prepared(x, w_hc, b2d, weight.shape[0], **kw)


# ---------------------------------------------------------------------------
# Demo / self-check
# ---------------------------------------------------------------------------

if __name__ == "__main__":
    key = jax.random.PRNGKey(0)
    k_x, k_w, k_b, k_x2, k_w2, k_b2 = jax.random.split(key, 6)

    # Small case matching the module: Final(hidden_size=32, num_classes=10).
    batch, hidden_size, num_classes = 8, 32, 10
    bound = 1.0 / jnp.sqrt(hidden_size)
    weight = jax.random.uniform(
        k_w, (num_classes, hidden_size), jnp.float32, -bound, bound)
    bias = jax.random.uniform(
        k_b, (num_classes,), jnp.float32, -bound, bound)
    x = jax.random.normal(k_x, (batch, hidden_size), jnp.float32)

    # One-time parameter prep (hoisted out of the per-step forward).
    w_hc, b2d = prepare_final_params(weight, bias)
    fwd = jax.jit(final_forward_prepared, static_argnames=("num_classes",))
    out = jax.block_until_ready(fwd(x, w_hc, b2d, num_classes=num_classes))

    ref = jnp.maximum(x @ weight.T + bias, 0.0)
    assert out.shape == (batch, num_classes)
    assert jnp.allclose(out, ref, atol=1e-5, rtol=1e-5)

    # Also exercise the tiled grid path (incl. the K-split f32 accumulator).
    b2_, h2_, c2_ = 24, 256, 20
    w2 = jax.random.uniform(k_w2, (c2_, h2_), jnp.float32, -0.05, 0.05)
    bb2 = jax.random.uniform(k_b2, (c2_,), jnp.float32, -0.05, 0.05)
    x2 = jax.random.normal(k_x2, (b2_, h2_), jnp.float32)
    w2_hc, bb2_2d = prepare_final_params(w2, bb2)
    out2 = final_forward_prepared(x2, w2_hc, bb2_2d, c2_,
                                  max_tm=16, max_tn=128, max_tk=128,
                                  force_tiled=True)
    out2 = jax.block_until_ready(out2)
    ref2 = jnp.maximum(x2 @ w2.T + bb2, 0.0)
    assert out2.shape == (b2_, c2_)
    assert jnp.allclose(out2, ref2, atol=1e-4, rtol=1e-4)

    print("KERNEL_OK")
</pallas_src>

<mosaic_0001>
module attributes {stable_mosaic.version = 11 : i64} {
  func.func @_final_kernel(%arg0: memref<8x128xf32, #tpu.memory_space<vmem>>, %arg1: memref<128x128xf32, #tpu.memory_space<vmem>>, %arg2: memref<1x128xf32, #tpu.memory_space<vmem>>, %arg3: memref<8x128xf32, #tpu.memory_space<vmem>>) attributes {dimension_semantics = [], scalar_prefetch = 0 : i64, scratch_operands = 0 : i64, tpu.core_type = #tpu.core_type<tc>} {
    %c0 = arith.constant 0 : index
    %c0_0 = arith.constant 0 : index
    %0 = vector.load %arg0[%c0, %c0_0] : memref<8x128xf32, #tpu.memory_space<vmem>>, vector<8x128xf32>
    %c0_1 = arith.constant 0 : index
    %c0_2 = arith.constant 0 : index
    %1 = vector.load %arg1[%c0_1, %c0_2] : memref<128x128xf32, #tpu.memory_space<vmem>>, vector<128x128xf32>
    %cst = arith.constant dense<0.000000e+00> : vector<8x128xf32>
    %2 = tpu.matmul %0, %1, %cst {dimension_numbers = #tpu.dot_dimension_numbers<[1], [0], [0], [1], [0, 0, 1, 1], [], []>} : vector<8x128xf32>, vector<128x128xf32>, vector<8x128xf32> -> vector<8x128xf32>
    %c0_3 = arith.constant 0 : index
    %c0_4 = arith.constant 0 : index
    %3 = vector.load %arg2[%c0_3, %c0_4] : memref<1x128xf32, #tpu.memory_space<vmem>>, vector<1x128xf32>
    %4 = vector.broadcast %3 : vector<1x128xf32> to vector<8x128xf32>
    %5 = arith.addf %2, %4 : vector<8x128xf32>
    %cst_5 = arith.constant 0.000000e+00 : f32
    %6 = vector.broadcast %cst_5 : f32 to vector<8x128xf32>
    %7 = arith.maximumf %5, %6 : vector<8x128xf32>
    %c0_6 = arith.constant 0 : index
    %c0_7 = arith.constant 0 : index
    %8 = vector.load %arg3[%c0_6, %c0_7] : memref<8x128xf32, #tpu.memory_space<vmem>>, vector<8x128xf32>
    tpu.vector_store %arg3[%c0_6, %c0_7], %7 {strides = array<i32>} : memref<8x128xf32, #tpu.memory_space<vmem>>, vector<8x128xf32>,
    return
  }
}

</mosaic_0001>

<llo_original>
// kernel: final_forward_prepared.1
$region0: #{final_forward_prepared.1}
  #allocation0 [shape = 'u32[]', space=smem, size = 0x4, offset = 0x4, fixed_abs, tag = 'smem constant byte address 0x4 - core index']
  #allocation1 [shape = 'u32[72,128]{1,0:T(1,128)}', space=vmem, size = 0x9000, scoped, tag = 'internal scratch']
  %s0 = inlined_call_operand.vmem [shape: f32[8,128], index: 0, kind: input, shape index: {}]
  %s1 = inlined_call_operand.hbm [shape: f32[128,128], index: 1, kind: input, shape index: {}]
  %s2 = inlined_call_operand.vmem [shape: f32[1,128], index: 2, kind: input, shape index: {}]
  %s3 = inlined_call_operand.hbm [shape: f32[8,128], index: 3, kind: output, shape index: {}]
  %s4 = sld [smem:[#allocation0]]
  $region26: #{final_forward_prepared.1} parent=0
    _
  %s6 = ssub.s32 1, %s4
  %s7 = scalar_select 0, %s6, %s4
  $region1: #{final_forward_prepared.1} parent=0
    #allocation2 [shape = 'u8[65536]{0}', space=vmem, size = 0x10000, scoped, tag = 'input window, operand 1, single buffered']
    #allocation3 [shape = 's32[1]{0}', space=sflag, size = 0x4, scoped, tag = 'scoped memory for final_forward_prepared.1']
    #allocation4 [shape = 's32[1]{0}', space=sflag, size = 0x4, scoped, tag = 'scoped memory for final_forward_prepared.1']
    #allocation5 [shape = 'u8[4096]{0}', space=vmem, size = 0x1000, scoped, tag = 'output window, operand 0, single buffered']
    %8 = vsyncpa [#allocation3], 0
    %9 = vsyncpa [#allocation4], 0
    // Predicated region
    $region2: #{final_forward_prepared.1} parent=1 // pred_check
      _
    $region3: #{final_forward_prepared.1} parent=1 // pred_check_branch
      %11 = sbr.rel (0) target = $region5
    $region4: #{final_forward_prepared.1} parent=1 // pred_region
      _
    $region5: #{final_forward_prepared.1} parent=1 // pred_fallthru
      _
    // Predicated region
    $region6: #{final_forward_prepared.1} parent=1 // pred_check
      _
    $region7: #{final_forward_prepared.1} parent=1 // pred_check_branch
      %13 = sbr.rel (0) target = $region9
    $region8: #{final_forward_prepared.1} parent=1 // pred_region
      %15 = vsyncadd [#allocation3], 0
      %s16 = sshll.u32 %s1, 4
      %s17 = int_to_ptr.hbm [resolvable:$true] %s16
      %s18 = sshll.u32 [#allocation2], 4
      %s19 = int_to_ptr.vmem [resolvable:$true] %s18
      %24 = dma.hbm_to_vmem [thread:$0]  %s17, 2048, %s19, [#allocation3], 128, 128, 8
    $region9: #{final_forward_prepared.1} parent=1 // pred_fallthru
      _
    // Predicated region
    $region10: #{final_forward_prepared.1} parent=1 // pred_check
      _
    $region11: #{final_forward_prepared.1} parent=1 // pred_check_branch
      %26 = sbr.rel (0) target = $region13
    $region12: #{final_forward_prepared.1} parent=1 // pred_region
      _
    $region13: #{final_forward_prepared.1} parent=1 // pred_fallthru
      _
    // Predicated region
    $region14: #{final_forward_prepared.1} parent=1 // pred_check
      _
    $region15: #{final_forward_prepared.1} parent=1 // pred_check_branch
      %28 = sbr.rel (0) target = $region17
    $region16: #{final_forward_prepared.1} parent=1 // pred_region
      %30 = dma.done [#allocation3], 2048
    $region17: #{final_forward_prepared.1} parent=1 // pred_fallthru
      _
    %v31 = vld [vmem:[%s0] sm:$0xff]
    %v32 = vld [vmem:[#allocation2] sm:$0xff]
    %v33 = vld [vmem:[#allocation2 + $0x8] sm:$0xff]
    %v34 = vld [vmem:[#allocation2 + $0x10] sm:$0xff]
    %v35 = vld [vmem:[#allocation2 + $0x18] sm:$0xff]
    %v36 = vld [vmem:[#allocation2 + $0x20] sm:$0xff]
    %v37 = vld [vmem:[#allocation2 + $0x28] sm:$0xff]
    %v38 = vld [vmem:[#allocation2 + $0x30] sm:$0xff]
    %v39 = vld [vmem:[#allocation2 + $0x38] sm:$0xff]
    %v40 = vld [vmem:[#allocation2 + $0x40] sm:$0xff]
    %v41 = vld [vmem:[#allocation2 + $0x48] sm:$0xff]
    %v42 = vld [vmem:[#allocation2 + $0x50] sm:$0xff]
    %v43 = vld [vmem:[#allocation2 + $0x58] sm:$0xff]
    %v44 = vld [vmem:[#allocation2 + $0x60] sm:$0xff]
    %v45 = vld [vmem:[#allocation2 + $0x68] sm:$0xff]
    %v46 = vld [vmem:[#allocation2 + $0x70] sm:$0xff]
    %v47 = vld [vmem:[#allocation2 + $0x78] sm:$0xff]
    %v48 = vld [vmem:[%s2] sm:$0x1]
    %v50 = vperm.slane %v48, 0
    %52 = vmatpush.msra.mxu0 %v47
    %53 = vmatpush.msra.mxu0 %v46
    %54 = vmatpush.msra.mxu0 %v45
    %55 = vmatpush.msra.mxu0 %v44
    %56 = vmatpush.msra.mxu0 %v43
    %57 = vmatpush.msra.mxu0 %v42
    %58 = vmatpush.msra.mxu0 %v41
    %59 = vmatpush.msra.mxu0 %v40
    %60 = vmatpush.msra.mxu0 %v39
    %61 = vmatpush.msra.mxu0 %v38
    %62 = vmatpush.msra.mxu0 %v37
    %63 = vmatpush.msra.mxu0 %v36
    %64 = vmatpush.msra.mxu0 %v35
    %65 = vmatpush.msra.mxu0 %v34
    %66 = vmatpush.msra.mxu0 %v33
    %67 = vmatpush.msra.mxu0 %v32
    %68 = vmatmul.f32.gmra.mxu0 %v31
    %v69 = vpop.f32.mrf.mxu0
    %v70 = vadd.f32 %v50, %v69
    %71 = vdwg.mxu0
    %v72 = vmax.f32 %v70, 0.0
    %73 = vst [vmem:[#allocation5] sm:$0xff] %v72
    // Predicated region
    $region18: #{final_forward_prepared.1} parent=1 // pred_check
      _
    $region19: #{final_forward_prepared.1} parent=1 // pred_check_branch
      %75 = sbr.rel (0) target = $region21
    $region20: #{final_forward_prepared.1} parent=1 // pred_region
      %77 = vsyncadd [#allocation4], 0
      %s79 = sshll.u32 [#allocation5], 4
      %s80 = int_to_ptr.vmem [resolvable:$true] %s79
      %s81 = sshll.u32 %s3, 4
      %s82 = int_to_ptr.hbm [resolvable:$true] %s81
      %84 = dma.vmem_to_hbm [thread:$0]  %s80, 128, %s82, [#allocation4]
    $region21: #{final_forward_prepared.1} parent=1 // pred_fallthru
      _
    // Predicated region
    $region22: #{final_forward_prepared.1} parent=1 // pred_check
      _
    $region23: #{final_forward_prepared.1} parent=1 // pred_check_branch
      %86 = sbr.rel (0) target = $region25
    $region24: #{final_forward_prepared.1} parent=1 // pred_region
      %88 = dma.done [#allocation4], 128
    $region25: #{final_forward_prepared.1} parent=1 // pred_fallthru
      _
    %89 = vsyncpa [#allocation3], 1
    %90 = vsyncpa [#allocation4], 1

</llo_original>
